<compile_context>
chip_gen: v5e
topology: v5e:2x2
jax: 0.10.0
libtpu: 0.0.40
codegen_flags: <defaults>
</compile_context>

<pallas_src>
import functools

import jax
import jax.numpy as jnp
from jax.experimental import pallas as pl
from jax.experimental.pallas import tpu as pltpu

LANES = 128
TARGET_BLOCK_BYTES = 4 * 1024 * 1024   # per-input block; 2 inputs x 2 buffers = 16 MiB
VMEM_LIMIT_BYTES = 32 * 1024 * 1024    # > v5e 16 MiB default, == v6e/v7x scoped default
NUM_CORES = 2                          # leading "parallel" axis; 2x HBM BW on v7x


def _as_slab(x):
    """Row-major flatten to a lane-dense (rows, 128) slab. No dtype cast, and no copy in
    the common case (total elements % 128 == 0); returns (slab, true_element_count)."""
    flat = x.reshape(-1)
    n = flat.shape[0]
    rem = n % LANES
    if rem:
        # Rare fallback: pad < 128 elements so the lane-dense reshape is legal.  The pad
        # values never matter -- the kernel masks every element past n in the edge block.
        flat = jnp.pad(flat, (0, LANES - rem))
    return flat.reshape(-1, LANES), n


def _reduce_kernel(term_fn, block_rows, nb_inner, nb_total, rem_last, acc_sublanes,
                   a_ref, b_ref, out_ref):
    """Grid (NUM_CORES, nb_inner): per-core streaming sum of term_fn(a, b) into a
    lane-resident (1, acc_sublanes, 128) accumulator (the output block itself).

    Static (closed-over) config:
      block_rows   rows per block
      nb_inner     blocks per core
      nb_total     total number of real blocks
      rem_last     valid elements in the last block (0 => last block is fully valid)
      acc_sublanes 8 when block_rows % 8 == 0, else 1
    """
    c = pl.program_id(0)
    i = pl.program_id(1)
    blk = c * nb_inner + i

    @pl.when(i == 0)
    def _():
        out_ref[...] = jnp.zeros_like(out_ref)

    def fold(term):
        # Sublane fold down to acc_sublanes partial rows; full scalar reduce is done once
        # in the wrapper.
        return jnp.sum(
            term.reshape(block_rows // acc_sublanes, acc_sublanes, LANES), axis=0
        ).reshape(1, acc_sublanes, LANES)

    # Blocks 0 .. full_blocks-1 are fully valid -> raw accumulate, no masking at all.
    full_blocks = nb_total if rem_last == 0 else nb_total - 1

    @pl.when(blk < full_blocks)
    def _():
        a = a_ref[...].astype(jnp.float32)
        b = b_ref[...].astype(jnp.float32)
        out_ref[...] += fold(term_fn(a, b))

    if rem_last != 0:
        # Only the single partial edge block pays for the iota/compare/select.  Block-
        # local ids (< block_rows*128) can never overflow int32 for any tensor size.
        @pl.when(blk == nb_total - 1)
        def _():
            a = a_ref[...].astype(jnp.float32)
            b = b_ref[...].astype(jnp.float32)
            term = term_fn(a, b)
            local_ids = (
                jax.lax.broadcasted_iota(jnp.int32, (block_rows, LANES), 0) * LANES
                + jax.lax.broadcasted_iota(jnp.int32, (block_rows, LANES), 1))
            term = jnp.where(local_ids < rem_last, term, 0.0)
            out_ref[...] += fold(term)

    # Clamped overhang blocks (blk >= nb_total) fall through: no accumulate.


def _reduce_sum(a, b, term_fn):
    """sum(term_fn(a, b)) over all elements via a Pallas streaming reduction.
    Returns (sum, element_count)."""
    a_slab, n_valid = _as_slab(a)
    b_slab, n_b = _as_slab(b)
    assert n_valid == n_b, "operands must have the same number of elements"
    rows = a_slab.shape[0]

    # Size blocks by bytes so bf16 inputs get 2x the rows; keep rows a multiple of the
    # native sublane pack (8 f32 / 16 bf16 / 32 int8) unless the full array is smaller.
    itemsize = jnp.dtype(a_slab.dtype).itemsize
    sublane_pack = max(1, 32 // (8 * itemsize)) * 8
    target_rows = max(sublane_pack, TARGET_BLOCK_BYTES // (LANES * itemsize))
    target_rows -= target_rows % sublane_pack
    block_rows = min(target_rows, rows)

    nb_total = pl.cdiv(rows, block_rows)
    nb_inner = pl.cdiv(nb_total, NUM_CORES)
    block_elems = block_rows * LANES

    # Valid elements in the last block; 0 means the last block is completely valid.
    rem_last = n_valid - (nb_total - 1) * block_elems
    if rem_last == block_elems:
        rem_last = 0

    acc_sublanes = 8 if block_rows % 8 == 0 else 1

    def in_map(c, i):
        blk = c * nb_inner + i
        # Clamp overhanging block indices in-bounds; the kernel skips their contribution.
        return (jnp.minimum(blk, nb_total - 1), 0)

    kernel = functools.partial(_reduce_kernel, term_fn, block_rows, nb_inner, nb_total,
                               rem_last, acc_sublanes)

    partial = pl.pallas_call(
        kernel,
        out_shape=jax.ShapeDtypeStruct((NUM_CORES, acc_sublanes, LANES), jnp.float32),
        grid=(NUM_CORES, nb_inner),
        in_specs=[
            pl.BlockSpec((block_rows, LANES), in_map),
            pl.BlockSpec((block_rows, LANES), in_map),
        ],
        out_specs=pl.BlockSpec((1, acc_sublanes, LANES), lambda c, i: (c, 0, 0)),
        compiler_params=pltpu.CompilerParams(
            dimension_semantics=("parallel", "arbitrary"),
            vmem_limit_bytes=VMEM_LIMIT_BYTES),
    )(a_slab, b_slab)

    return jnp.sum(partial), n_valid


def _sq_err(a, b):
    d = a - b
    return d * d


def _kl_term(mu, logvar):
    return 1.0 + logvar - mu * mu - jnp.exp(logvar)


@jax.jit
def vae_step_losses(img_hat, img_target, mu, logvar, beta):
    """Mirrors VAE_Model.training_one_step_* / val_one_step loss math + Generate_PSNR."""
    sse, n_img = _reduce_sum(img_hat, img_target, _sq_err)
    kl_sum, n_lat = _reduce_sum(mu, logvar, _kl_term)

    mse = sse / jnp.float32(n_img)
    kld = jnp.maximum(-0.5 * kl_sum / jnp.float32(n_lat), 0.0)  # torch.clamp(KLD, min=0)
    loss = mse + beta * kld
    # 20*log10(1/sqrt(mse)) == -10*log10(mse); 100.0 when mse == 0 (where avoids the inf).
    psnr = jnp.where(mse == 0.0, jnp.float32(100.0), -10.0 * jnp.log10(mse))
    return mse, kld, loss, psnr


if __name__ == "__main__":
    # Small shapes implied by the forward path: img/label [B, T, C, H, W].
    B, T, C, H, W = 2, 4, 3, 16, 16
    N_dim = 12
    beta = 0.5  # kl_annealing.get_beta() -- deterministic synthetic value

    key = jax.random.PRNGKey(0)
    k_img, k_pred, k_mu, k_lv, k_a, k_b = jax.random.split(key, 6)

    img = jax.random.uniform(k_img, (B, T, C, H, W), dtype=jnp.float32)
    # Synthesized outputs of the (undefined) Generator / Gaussian_Predictor:
    img_hat = jax.random.uniform(k_pred, (B * (T - 1), C, H, W), dtype=jnp.float32)
    mu = 0.1 * jax.random.normal(k_mu, (B * (T - 1), N_dim, H, W), dtype=jnp.float32)
    logvar = 0.1 * jax.random.normal(k_lv, (B * (T - 1), N_dim, H, W), dtype=jnp.float32)

    img_target = img[:, 1:].reshape(-1, C, H, W)

    mse, kld, loss, psnr = vae_step_losses(img_hat, img_target, mu, logvar, beta)
    jax.block_until_ready((mse, kld, loss, psnr))

    # Pure-JAX reference check (same semantics as the torch code).
    ref_mse = jnp.mean((img_hat - img_target) ** 2)
    ref_kld = jnp.maximum(
        -0.5 * jnp.mean(1.0 + logvar - mu ** 2 - jnp.exp(logvar)), 0.0)
    ref_loss = ref_mse + beta * ref_kld
    ref_psnr = jnp.where(ref_mse == 0.0, 100.0,
                         20.0 * jnp.log10(1.0 / jnp.sqrt(ref_mse)))

    assert jnp.allclose(mse, ref_mse, rtol=1e-5, atol=1e-6), (mse, ref_mse)
    assert jnp.allclose(kld, ref_kld, rtol=1e-5, atol=1e-6), (kld, ref_kld)
    assert jnp.allclose(loss, ref_loss, rtol=1e-5, atol=1e-6), (loss, ref_loss)
    assert jnp.allclose(psnr, ref_psnr, rtol=1e-4, atol=1e-4), (psnr, ref_psnr)

    # Extra coverage of the reduction kernel paths:
    # (a) multi-block grid (both cores) + partial edge block on the second core.
    a_big = jax.random.normal(k_a, (1024, 1030), dtype=jnp.float32)
    b_big = jax.random.normal(k_b, (1024, 1030), dtype=jnp.float32)
    sse_big, n_big = _reduce_sum(a_big, b_big, _sq_err)
    jax.block_until_ready(sse_big)
    ref_big = jnp.sum((a_big - b_big) ** 2)
    assert n_big == a_big.size
    assert jnp.allclose(sse_big, ref_big, rtol=1e-5, atol=1e-3), (sse_big, ref_big)

    # (b) ragged lane tail (total % 128 != 0) -> wrapper pad + masked edge block.
    a_rag = jax.random.normal(k_a, (7, 13, 5), dtype=jnp.float32)
    b_rag = jax.random.normal(k_b, (7, 13, 5), dtype=jnp.float32)
    sse_rag, n_rag = _reduce_sum(a_rag, b_rag, _sq_err)
    jax.block_until_ready(sse_rag)
    ref_rag = jnp.sum((a_rag - b_rag) ** 2)
    assert n_rag == a_rag.size
    assert jnp.allclose(sse_rag, ref_rag, rtol=1e-5, atol=1e-4), (sse_rag, ref_rag)

    print("KERNEL_OK")
</pallas_src>

<mosaic_0001>
module attributes {stable_mosaic.version = 11 : i64} {
  func.func @_reduce_kernel(%arg0: i32, %arg1: i32, %arg2: memref<36x128xf32, #tpu.memory_space<vmem>>, %arg3: memref<36x128xf32, #tpu.memory_space<vmem>>, %arg4: memref<1x1x128xf32, #tpu.memory_space<vmem>>) attributes {dimension_semantics = [#tpu.dimension_semantics<parallel>, #tpu.dimension_semantics<arbitrary>], iteration_bounds = array<i64: 2, 1>, scalar_prefetch = 0 : i64, scratch_operands = 0 : i64, tpu.core_type = #tpu.core_type<tc>, window_params = [{transform_indices = @transform_0, window_bounds = array<i64: 36, 128>}, {transform_indices = @transform_1, window_bounds = array<i64: 36, 128>}, {transform_indices = @transform_2, window_bounds = array<i64: 1, 1, 128>}]} {
    %c1_i32 = arith.constant 1 : i32
    %0 = arith.muli %arg0, %c1_i32 : i32
    %1 = arith.addi %0, %arg1 : i32
    %c0_i32 = arith.constant 0 : i32
    %2 = arith.cmpi eq, %arg1, %c0_i32 : i32
    %3 = arith.extui %2 : i1 to i32
    %c0_i32_0 = arith.constant 0 : i32
    %4 = arith.cmpi ne, %3, %c0_i32_0 : i32
    scf.if %4 {
      %cst = arith.constant 0.000000e+00 : f32
      %8 = vector.broadcast %cst : f32 to vector<1x1x128xf32>
      %c0 = arith.constant 0 : index
      %c0_3 = arith.constant 0 : index
      %c0_4 = arith.constant 0 : index
      %9 = vector.load %arg4[%c0, %c0_3, %c0_4] : memref<1x1x128xf32, #tpu.memory_space<vmem>>, vector<1x1x128xf32>
      tpu.vector_store %arg4[%c0, %c0_3, %c0_4], %8 {strides = array<i32>} : memref<1x1x128xf32, #tpu.memory_space<vmem>>, vector<1x1x128xf32>,
    } else {
    }
    %c1_i32_1 = arith.constant 1 : i32
    %5 = arith.cmpi slt, %1, %c1_i32_1 : i32
    %6 = arith.extui %5 : i1 to i32
    %c0_i32_2 = arith.constant 0 : i32
    %7 = arith.cmpi ne, %6, %c0_i32_2 : i32
    scf.if %7 {
      %c0 = arith.constant 0 : index
      %c0_3 = arith.constant 0 : index
      %8 = vector.load %arg2[%c0, %c0_3] : memref<36x128xf32, #tpu.memory_space<vmem>>, vector<36x128xf32>
      %c0_4 = arith.constant 0 : index
      %c0_5 = arith.constant 0 : index
      %9 = vector.load %arg3[%c0_4, %c0_5] : memref<36x128xf32, #tpu.memory_space<vmem>>, vector<36x128xf32>
      %c0_6 = arith.constant 0 : index
      %c0_7 = arith.constant 0 : index
      %c0_8 = arith.constant 0 : index
      %10 = vector.load %arg4[%c0_6, %c0_7, %c0_8] : memref<1x1x128xf32, #tpu.memory_space<vmem>>, vector<1x1x128xf32>
      %11 = arith.subf %8, %9 : vector<36x128xf32>
      %12 = arith.mulf %11, %11 : vector<36x128xf32>
      %13 = vector.shape_cast %12 : vector<36x128xf32> to vector<36x1x128xf32>
      %cst = arith.constant dense<0.000000e+00> : vector<1x128xf32>
      %14 = vector.multi_reduction <add>, %13, %cst [0] : vector<36x1x128xf32> to vector<1x128xf32>
      %15 = vector.shape_cast %14 : vector<1x128xf32> to vector<1x1x128xf32>
      %16 = arith.addf %10, %15 : vector<1x1x128xf32>
      %c0_9 = arith.constant 0 : index
      %c0_10 = arith.constant 0 : index
      %c0_11 = arith.constant 0 : index
      %17 = vector.load %arg4[%c0_9, %c0_10, %c0_11] : memref<1x1x128xf32, #tpu.memory_space<vmem>>, vector<1x1x128xf32>
      tpu.vector_store %arg4[%c0_9, %c0_10, %c0_11], %16 {strides = array<i32>} : memref<1x1x128xf32, #tpu.memory_space<vmem>>, vector<1x1x128xf32>,
    } else {
    }
    return
  }
  func.func @transform_0(%arg0: i32, %arg1: i32) -> (i32, i32) {
    %c1_i32 = arith.constant 1 : i32
    %0 = arith.muli %arg0, %c1_i32 : i32
    %1 = arith.addi %0, %arg1 : i32
    %c0_i32 = arith.constant 0 : i32
    %2 = arith.minsi %1, %c0_i32 : i32
    %c0_i32_0 = arith.constant 0 : i32
    %c0_i32_1 = arith.constant 0 : i32
    return %2, %c0_i32_0 : i32, i32
  }
  func.func @transform_1(%arg0: i32, %arg1: i32) -> (i32, i32) {
    %c1_i32 = arith.constant 1 : i32
    %0 = arith.muli %arg0, %c1_i32 : i32
    %1 = arith.addi %0, %arg1 : i32
    %c0_i32 = arith.constant 0 : i32
    %2 = arith.minsi %1, %c0_i32 : i32
    %c0_i32_0 = arith.constant 0 : i32
    %c0_i32_1 = arith.constant 0 : i32
    return %2, %c0_i32_0 : i32, i32
  }
  func.func @transform_2(%arg0: i32, %arg1: i32) -> (i32, i32, i32) {
    %c0_i32 = arith.constant 0 : i32
    %c0_i32_0 = arith.constant 0 : i32
    %c0_i32_1 = arith.constant 0 : i32
    return %arg0, %c0_i32, %c0_i32_0 : i32, i32, i32
  }
}

module attributes {stable_mosaic.version = 11 : i64} {
  func.func @_reduce_kernel(%arg0: i32, %arg1: i32, %arg2: memref<144x128xf32, #tpu.memory_space<vmem>>, %arg3: memref<144x128xf32, #tpu.memory_space<vmem>>, %arg4: memref<1x8x128xf32, #tpu.memory_space<vmem>>) attributes {dimension_semantics = [#tpu.dimension_semantics<parallel>, #tpu.dimension_semantics<arbitrary>], iteration_bounds = array<i64: 2, 1>, scalar_prefetch = 0 : i64, scratch_operands = 0 : i64, tpu.core_type = #tpu.core_type<tc>, window_params = [{transform_indices = @transform_0, window_bounds = array<i64: 144, 128>}, {transform_indices = @transform_1, window_bounds = array<i64: 144, 128>}, {transform_indices = @transform_2, window_bounds = array<i64: 1, 8, 128>}]} {
    %c1_i32 = arith.constant 1 : i32
    %0 = arith.muli %arg0, %c1_i32 : i32
    %1 = arith.addi %0, %arg1 : i32
    %c0_i32 = arith.constant 0 : i32
    %2 = arith.cmpi eq, %arg1, %c0_i32 : i32
    %3 = arith.extui %2 : i1 to i32
    %c0_i32_0 = arith.constant 0 : i32
    %4 = arith.cmpi ne, %3, %c0_i32_0 : i32
    scf.if %4 {
      %cst = arith.constant 0.000000e+00 : f32
      %8 = vector.broadcast %cst : f32 to vector<1x8x128xf32>
      %c0 = arith.constant 0 : index
      %c0_3 = arith.constant 0 : index
      %c0_4 = arith.constant 0 : index
      %9 = vector.load %arg4[%c0, %c0_3, %c0_4] : memref<1x8x128xf32, #tpu.memory_space<vmem>>, vector<1x8x128xf32>
      tpu.vector_store %arg4[%c0, %c0_3, %c0_4], %8 {strides = array<i32>} : memref<1x8x128xf32, #tpu.memory_space<vmem>>, vector<1x8x128xf32>,
    } else {
    }
    %c1_i32_1 = arith.constant 1 : i32
    %5 = arith.cmpi slt, %1, %c1_i32_1 : i32
    %6 = arith.extui %5 : i1 to i32
    %c0_i32_2 = arith.constant 0 : i32
    %7 = arith.cmpi ne, %6, %c0_i32_2 : i32
    scf.if %7 {
      %c0 = arith.constant 0 : index
      %c0_3 = arith.constant 0 : index
      %8 = vector.load %arg2[%c0, %c0_3] : memref<144x128xf32, #tpu.memory_space<vmem>>, vector<144x128xf32>
      %c0_4 = arith.constant 0 : index
      %c0_5 = arith.constant 0 : index
      %9 = vector.load %arg3[%c0_4, %c0_5] : memref<144x128xf32, #tpu.memory_space<vmem>>, vector<144x128xf32>
      %c0_6 = arith.constant 0 : index
      %c0_7 = arith.constant 0 : index
      %c0_8 = arith.constant 0 : index
      %10 = vector.load %arg4[%c0_6, %c0_7, %c0_8] : memref<1x8x128xf32, #tpu.memory_space<vmem>>, vector<1x8x128xf32>
      %cst = arith.constant 1.000000e+00 : f32
      %11 = vector.broadcast %cst : f32 to vector<144x128xf32>
      %12 = arith.addf %11, %9 : vector<144x128xf32>
      %13 = arith.mulf %8, %8 : vector<144x128xf32>
      %14 = arith.subf %12, %13 : vector<144x128xf32>
      %15 = math.exp %9 : vector<144x128xf32>
      %16 = arith.subf %14, %15 : vector<144x128xf32>
      %17 = vector.shape_cast %16 : vector<144x128xf32> to vector<18x8x128xf32>
      %cst_9 = arith.constant dense<0.000000e+00> : vector<8x128xf32>
      %18 = vector.multi_reduction <add>, %17, %cst_9 [0] : vector<18x8x128xf32> to vector<8x128xf32>
      %19 = vector.shape_cast %18 : vector<8x128xf32> to vector<1x8x128xf32>
      %20 = arith.addf %10, %19 : vector<1x8x128xf32>
      %c0_10 = arith.constant 0 : index
      %c0_11 = arith.constant 0 : index
      %c0_12 = arith.constant 0 : index
      %21 = vector.load %arg4[%c0_10, %c0_11, %c0_12] : memref<1x8x128xf32, #tpu.memory_space<vmem>>, vector<1x8x128xf32>
      tpu.vector_store %arg4[%c0_10, %c0_11, %c0_12], %20 {strides = array<i32>} : memref<1x8x128xf32, #tpu.memory_space<vmem>>, vector<1x8x128xf32>,
    } else {
    }
    return
  }
  func.func @transform_0(%arg0: i32, %arg1: i32) -> (i32, i32) {
    %c1_i32 = arith.constant 1 : i32
    %0 = arith.muli %arg0, %c1_i32 : i32
    %1 = arith.addi %0, %arg1 : i32
    %c0_i32 = arith.constant 0 : i32
    %2 = arith.minsi %1, %c0_i32 : i32
    %c0_i32_0 = arith.constant 0 : i32
    %c0_i32_1 = arith.constant 0 : i32
    return %2, %c0_i32_0 : i32, i32
  }
  func.func @transform_1(%arg0: i32, %arg1: i32) -> (i32, i32) {
    %c1_i32 = arith.constant 1 : i32
    %0 = arith.muli %arg0, %c1_i32 : i32
    %1 = arith.addi %0, %arg1 : i32
    %c0_i32 = arith.constant 0 : i32
    %2 = arith.minsi %1, %c0_i32 : i32
    %c0_i32_0 = arith.constant 0 : i32
    %c0_i32_1 = arith.constant 0 : i32
    return %2, %c0_i32_0 : i32, i32
  }
  func.func @transform_2(%arg0: i32, %arg1: i32) -> (i32, i32, i32) {
    %c0_i32 = arith.constant 0 : i32
    %c0_i32_0 = arith.constant 0 : i32
    %c0_i32_1 = arith.constant 0 : i32
    return %arg0, %c0_i32, %c0_i32_0 : i32, i32, i32
  }
}

</mosaic_0001>

<llo_original>
// kernel: vae_step_losses.2
$region0: #{vae_step_losses.2}
  #allocation0 [shape = 'u32[]', space=smem, size = 0x4, offset = 0x4, fixed_abs, tag = 'smem constant byte address 0x4 - core index']
  #allocation1 [shape = 'u32[72,128]{1,0:T(1,128)}', space=vmem, size = 0x9000, scoped, tag = 'internal scratch']
  %s0 = inlined_call_operand.vmem [shape: f32[36,128], index: 0, kind: input, shape index: {}]
  %s1 = inlined_call_operand.vmem [shape: f32[36,128], index: 1, kind: input, shape index: {}]
  %s2 = inlined_call_operand.vmem [shape: f32[2,1,128], index: 2, kind: output, shape index: {}]
  %s3 = sld [smem:[#allocation0]]
  $region49: #{vae_step_losses.2} parent=0
    _
  %s5 = ssub.s32 1, %s3
  %s6 = scalar_select 0, %s5, %s3
  loop: start=0, step=1, limit=4
  $region2: #{vae_step_losses.2} parent=0 // loop_pre_header
    _
  $region3: #{vae_step_losses.2} parent=0 // loop_header
    %s8 = sphi 0, %s12
    %p9 = scmp.ge.s32.totalorder %s8, 4
    %s15 = sphi 0, %s27
    %s16 = sphi 0, %s23
    %s17 = sphi 0, %s15
    %s18 = sphi 0, %s16
    %s19 = sphi 0, %s17
    %s20 = sphi 0, %s18
    %s36 = sphi 0, %s38
    %s39 = sphi 0, %s36
    %s40 = sphi 0, %s39
    %s56 = sphi 0, %s40
    %s68 = sphi 0, %s70
    %s71 = sphi 0, %s68
    %s72 = sphi 0, %s71
    %s88 = sphi 0, %s72
    %s94 = sphi 0, %s96
    %s97 = sphi 0, %s94
    %s98 = sphi 0, %s97
    %s114 = sphi 0, %s98
  $region4: #{vae_step_losses.2} parent=0 // loop_header_branch
    %11 = sbr.rel (%p9) target = $region8
  $region5: #{vae_step_losses.2} parent=0 // loop_body
    %s13 = ssub.s32 %s8, 1
    %s14 = ssub.s32 %s8, 2
    %s21 = sadd.s32 1, %s16
    %p22 = scmp.ge.s32.totalorder %s21, 1
    %s23 = scalar_select %p22, 0, %s21
    %s24 = sadd.s32 1, %s15
    %s25 = scalar_select %p22, %s24, %s15
    %p26 = scmp.ge.s32.totalorder %s25, 2
    %s27 = scalar_select %p26, 0, %s25
    %s28 = sadd.s32 %s15, %s16
    %p29 = scmp.lt.s32.totalorder %s28, 0
    %s30 = scalar_select %p29, %s28, 0
    %s31 = sadd.s32 %s27, %s23
    %p32 = scmp.lt.s32.totalorder %s31, 0
    %s33 = scalar_select %p32, %s31, 0
    %s34 = ssub.s32 %s30, %s33
    %p35 = scmp.eq.s32.totalorder %s34, 0
    %s37 = sadd.s32 %s36, 1
    %s38 = scalar_select %p35, %s36, %s37
    %p41 = pneg %p35
    %p42 = scmp.eq.s32.totalorder %s8, 1
    %p43 = por %p41, %p42
    %p44 = scmp.ne.s32.totalorder %s36, %s39
    %p45 = scmp.eq.s32.totalorder %s8, 0
    %p46 = por %p44, %p45
    %p47 = scmp.ne.s32.totalorder %s36, %s39
    %p48 = scmp.eq.s32.totalorder %s13, 1
    %p49 = por %p47, %p48
    %p50 = scmp.ne.s32.totalorder %s39, %s40
    %p51 = scmp.eq.s32.totalorder %s13, 0
    %p52 = por %p50, %p51
    %p53 = scmp.ne.s32.totalorder %s39, %s40
    %p54 = scmp.eq.s32.totalorder %s14, 1
    %p55 = por %p53, %p54
    %p57 = scmp.ne.s32.totalorder %s40, %s56
    %p58 = scmp.eq.s32.totalorder %s14, 0
    %p59 = por %p57, %p58
    %s60 = sadd.s32 %s15, %s16
    %p61 = scmp.lt.s32.totalorder %s60, 0
    %s62 = scalar_select %p61, %s60, 0
    %s63 = sadd.s32 %s27, %s23
    %p64 = scmp.lt.s32.totalorder %s63, 0
    %s65 = scalar_select %p64, %s63, 0
    %s66 = ssub.s32 %s62, %s65
    %p67 = scmp.eq.s32.totalorder %s66, 0
    %s69 = sadd.s32 %s68, 1
    %s70 = scalar_select %p67, %s68, %s69
    %p73 = pneg %p67
    %p74 = scmp.eq.s32.totalorder %s8, 1
    %p75 = por %p73, %p74
    %p76 = scmp.ne.s32.totalorder %s68, %s71
    %p77 = scmp.eq.s32.totalorder %s8, 0
    %p78 = por %p76, %p77
    %p79 = scmp.ne.s32.totalorder %s68, %s71
    %p80 = scmp.eq.s32.totalorder %s13, 1
    %p81 = por %p79, %p80
    %p82 = scmp.ne.s32.totalorder %s71, %s72
    %p83 = scmp.eq.s32.totalorder %s13, 0
    %p84 = por %p82, %p83
    %p85 = scmp.ne.s32.totalorder %s71, %s72
    %p86 = scmp.eq.s32.totalorder %s14, 1
    %p87 = por %p85, %p86
    %p89 = scmp.ne.s32.totalorder %s72, %s88
    %p90 = scmp.eq.s32.totalorder %s14, 0
    %p91 = por %p89, %p90
    %s92 = ssub.s32 %s15, %s27
    %p93 = scmp.eq.s32.totalorder %s92, 0
    %s95 = sadd.s32 %s94, 1
    %s96 = scalar_select %p93, %s94, %s95
    %p99 = pneg %p93
    %p100 = scmp.eq.s32.totalorder %s8, 1
    %p101 = por %p99, %p100
    %p102 = scmp.ne.s32.totalorder %s94, %s97
    %p103 = scmp.eq.s32.totalorder %s8, 0
    %p104 = por %p102, %p103
    %p105 = scmp.ne.s32.totalorder %s94, %s97
    %p106 = scmp.eq.s32.totalorder %s13, 1
    %p107 = por %p105, %p106
    %p108 = scmp.ne.s32.totalorder %s97, %s98
    %p109 = scmp.eq.s32.totalorder %s13, 0
    %p110 = por %p108, %p109
    %p111 = scmp.ne.s32.totalorder %s97, %s98
    %p112 = scmp.eq.s32.totalorder %s14, 1
    %p113 = por %p111, %p112
    %p115 = scmp.ne.s32.totalorder %s98, %s114
    %p116 = scmp.eq.s32.totalorder %s14, 0
    %p117 = por %p115, %p116
    %p118 = scmp.le.s32.totalorder 1, %s8
    %p119 = scmp.lt.s32.totalorder %s8, 3
    %p120 = pnand %p118, %p119
    %p121 = pneg %p120
    // Predicated region
    $region9: #{vae_step_losses.2} parent=5 // pred_check
      _
    $region10: #{vae_step_losses.2} parent=5 // pred_check_branch
      %123 = sbr.rel (%p120) target = $region12
    $region11: #{vae_step_losses.2} parent=5 // pred_region
      %s124 = ssub.s32 %s8, 1
    $region12: #{vae_step_losses.2} parent=5 // pred_fallthru
      _
    %p125 = scmp.lt.s32.totalorder %s8, 2
    // Predicated region
    $region13: #{vae_step_losses.2} parent=5 // pred_check
      %p126 = pneg %p125
    $region14: #{vae_step_losses.2} parent=5 // pred_check_branch
      %128 = sbr.rel (%p126) target = $region16
    $region15: #{vae_step_losses.2} parent=5 // pred_region
      // Predicated region
      $region17: #{vae_step_losses.2} parent=15 // pred_check
        %p129 = pneg %p46
      $region18: #{vae_step_losses.2} parent=15 // pred_check_branch
        %131 = sbr.rel (%p129) target = $region20
      $region19: #{vae_step_losses.2} parent=15 // pred_region
        %s132 = sadd.s32 %s15, %s16
        %p133 = scmp.lt.s32.totalorder %s132, 0
        %s134 = scalar_select %p133, %s132, 0
        %s135 = smul.u32 5, %s134
        %p136 = scmp.lt.s32.totalorder %s135, 4
        %s137 = scalar_select %p136, %s135, 4
        %s138 = smul.addr %s137, 8
        %s139 = scalar_lea.vmem %s0, %s138
        %s140 = sadd.s32 %s15, %s16
        %p141 = scmp.lt.s32.totalorder %s140, 0
        %s142 = scalar_select %p141, %s140, 0
        %s143 = smul.u32 5, %s142
      $region20: #{vae_step_losses.2} parent=15 // pred_fallthru
        _
      // Predicated region
      $region21: #{vae_step_losses.2} parent=15 // pred_check
        %p144 = pneg %p78
      $region22: #{vae_step_losses.2} parent=15 // pred_check_branch
        %146 = sbr.rel (%p144) target = $region24
      $region23: #{vae_step_losses.2} parent=15 // pred_region
        %s147 = sadd.s32 %s15, %s16
        %p148 = scmp.lt.s32.totalorder %s147, 0
        %s149 = scalar_select %p148, %s147, 0
        %s150 = smul.u32 5, %s149
        %p151 = scmp.lt.s32.totalorder %s150, 4
        %s152 = scalar_select %p151, %s150, 4
        %s153 = smul.addr %s152, 8
        %s154 = scalar_lea.vmem %s1, %s153
        %s155 = sadd.s32 %s15, %s16
        %p156 = scmp.lt.s32.totalorder %s155, 0
        %s157 = scalar_select %p156, %s155, 0
        %s158 = smul.u32 5, %s157
      $region24: #{vae_step_losses.2} parent=15 // pred_fallthru
        _
    $region16: #{vae_step_losses.2} parent=5 // pred_fallthru
      _
    %p159 = scmp.le.s32.totalorder 1, %s8
    %p160 = scmp.lt.s32.totalorder %s8, 3
    %p161 = pnand %p159, %p160
    %p162 = pneg %p161
    // Predicated region
    $region25: #{vae_step_losses.2} parent=5 // pred_check
      _
    $region26: #{vae_step_losses.2} parent=5 // pred_check_branch
      %164 = sbr.rel (%p161) target = $region28
    $region27: #{vae_step_losses.2} parent=5 // pred_region
      %s165 = ssub.s32 %s8, 1
      %s166 = sadd.s32 %s17, %s18
      %p167 = scmp.lt.s32.totalorder %s166, 0
      %s168 = scalar_select %p167, %s166, 0
      %s169 = smul.u32 5, %s168
      %p170 = scmp.lt.s32.totalorder %s169, 4
      %s171 = scalar_select %p170, %s169, 4
      %s172 = smul.addr %s171, 8
      %s173 = scalar_lea.vmem %s0, %s172
      %p174 = pneg %p52
      %p175 = pneg %p49
      %s176 = sadd.s32 %s17, %s18
      %p177 = scmp.lt.s32.totalorder %s176, 0
      %s178 = scalar_select %p177, %s176, 0
      %s179 = smul.u32 5, %s178
      %p180 = scmp.lt.s32.totalorder %s179, 4
      %s181 = scalar_select %p180, %s179, 4
      %s182 = smul.addr %s181, 8
      %s183 = scalar_lea.vmem %s1, %s182
      %p184 = pneg %p84
      %p185 = pneg %p81
      %p186 = pneg %p110
      %p187 = pneg %p107
      %p188 = scmp.lt.s32.totalorder %s17, 1
      %s189 = scalar_select %p188, %s17, 1
      %s190 = scalar_lea.vmem %s2, %s189
      %s191 = sadd.s32 %s17, %s18
      %p192 = scmp.lt.s32.totalorder %s191, 0
      %s193 = scalar_select %p192, %s191, 0
      %s194 = smul.u32 5, %s193
      %p195 = scmp.lt.s32.totalorder %s194, 4
      %s196 = scalar_select %p195, %s194, 4
      %s197 = smul.addr %s196, 8
      %s198 = scalar_lea.vmem %s0, %s197
      %s199 = sadd.s32 %s17, %s18
      %p200 = scmp.lt.s32.totalorder %s199, 0
      %s201 = scalar_select %p200, %s199, 0
      %s202 = smul.u32 5, %s201
      %s203 = sadd.s32 %s17, %s18
      %p204 = scmp.lt.s32.totalorder %s203, 0
      %s205 = scalar_select %p204, %s203, 0
      %s206 = smul.u32 5, %s205
      %p207 = scmp.lt.s32.totalorder %s206, 4
      %s208 = scalar_select %p207, %s206, 4
      %s209 = smul.addr %s208, 8
      %s210 = scalar_lea.vmem %s1, %s209
      %s211 = sadd.s32 %s17, %s18
      %p212 = scmp.lt.s32.totalorder %s211, 0
      %s213 = scalar_select %p212, %s211, 0
      %s214 = smul.u32 5, %s213
      %p215 = scmp.lt.s32.totalorder %s17, 1
      %s216 = scalar_select %p215, %s17, 1
      %s217 = scalar_lea.vmem %s2, %s216
      %s218 = sadd.s32 %s17, %s18
      %p219 = scmp.eq.s32.totalorder %s18, 0
      // Predicated region
      $region29: #{vae_step_losses.2} parent=27 // pred_check
        %p220 = pneg %p219
      $region30: #{vae_step_losses.2} parent=27 // pred_check_branch
        %222 = sbr.rel (%p220) target = $region32
      $region31: #{vae_step_losses.2} parent=27 // pred_region
        %223 = vst [vmem:[%s217] sm:$0x1] 0.0
      $region32: #{vae_step_losses.2} parent=27 // pred_fallthru
        _
      %p224 = scmp.lt.s32.totalorder %s218, 1
      // Predicated region
      $region33: #{vae_step_losses.2} parent=27 // pred_check
        %p225 = pneg %p224
      $region34: #{vae_step_losses.2} parent=27 // pred_check_branch
        %227 = sbr.rel (%p225) target = $region36
      $region35: #{vae_step_losses.2} parent=27 // pred_region
        %v228 = vld [vmem:[%s198] sm:$0xff]
        %v229 = vld [vmem:[%s198 + $0x8] sm:$0xff]
        %v230 = vld [vmem:[%s198 + $0x10] sm:$0xff]
        %v231 = vld [vmem:[%s198 + $0x18] sm:$0xff]
        %v232 = vld [vmem:[%s198 + $0x20] sm:$0xf]
        %v233 = vld [vmem:[%s210] sm:$0xff]
        %v234 = vld [vmem:[%s210 + $0x8] sm:$0xff]
        %v235 = vld [vmem:[%s210 + $0x10] sm:$0xff]
        %v236 = vld [vmem:[%s210 + $0x18] sm:$0xff]
        %v237 = vld [vmem:[%s210 + $0x20] sm:$0xf]
        %v238 = vld [vmem:[%s217] sm:$0x1]
        %v239 = vsub.f32 %v228, %v233
        %v240 = vsub.f32 %v229, %v234
        %v241 = vsub.f32 %v230, %v235
        %v242 = vsub.f32 %v231, %v236
        %v243 = vsub.f32 %v232, %v237
        %v244 = vmul.f32 %v239, %v239
        %v245 = vmul.f32 %v240, %v240
        %v246 = vmul.f32 %v241, %v241
        %v247 = vmul.f32 %v242, %v242
        %v248 = vmul.f32 %v243, %v243
        %v254 = vrot.slane %v244, 1
        %v255 = vrot.slane %v244, 2
        %v256 = vrot.slane %v244, 3
        %v257 = vrot.slane %v244, 4
        %v258 = vrot.slane %v244, 5
        %v259 = vrot.slane %v244, 6
        %v260 = vrot.slane %v244, 7
        %v261 = vrot.slane %v245, 1
        %v262 = vrot.slane %v245, 2
        %v263 = vrot.slane %v245, 3
        %v264 = vrot.slane %v245, 4
        %v265 = vrot.slane %v245, 5
        %v266 = vrot.slane %v245, 6
        %v267 = vrot.slane %v245, 7
        %v268 = vrot.slane %v246, 1
        %v269 = vrot.slane %v246, 2
        %v270 = vrot.slane %v246, 3
        %v271 = vrot.slane %v246, 4
        %v272 = vrot.slane %v246, 5
        %v273 = vrot.slane %v246, 6
        %v274 = vrot.slane %v246, 7
        %v275 = vrot.slane %v247, 1
        %v276 = vrot.slane %v247, 2
        %v277 = vrot.slane %v247, 3
        %v278 = vrot.slane %v247, 4
        %v279 = vrot.slane %v247, 5
        %v280 = vrot.slane %v247, 6
        %v281 = vrot.slane %v247, 7
        %v282 = vrot.slane %v248, 1
        %v283 = vrot.slane %v248, 2
        %v284 = vrot.slane %v248, 3
        %vm316 = vcmask 1040384
        %v317 = vsel %vm316, %v244, 0.0
        %v318 = vsel %vm316, %v254, 0.0
        %v319 = vadd.f32 %v317, %v318
        %v320 = vsel %vm316, %v255, 0.0
        %v321 = vadd.f32 %v319, %v320
        %v322 = vsel %vm316, %v256, 0.0
        %v323 = vadd.f32 %v321, %v322
        %v324 = vsel %vm316, %v257, 0.0
        %v325 = vadd.f32 %v323, %v324
        %v326 = vsel %vm316, %v258, 0.0
        %v327 = vadd.f32 %v325, %v326
        %v328 = vsel %vm316, %v259, 0.0
        %v329 = vadd.f32 %v327, %v328
        %v330 = vsel %vm316, %v260, 0.0
        %v331 = vadd.f32 %v329, %v330
        %v332 = vsel %vm316, %v245, 0.0
        %v333 = vadd.f32 %v331, %v332
        %v334 = vsel %vm316, %v261, 0.0
        %v335 = vadd.f32 %v333, %v334
        %v336 = vsel %vm316, %v262, 0.0
        %v337 = vadd.f32 %v335, %v336
        %v338 = vsel %vm316, %v263, 0.0
        %v339 = vadd.f32 %v337, %v338
        %v340 = vsel %vm316, %v264, 0.0
        %v341 = vadd.f32 %v339, %v340
        %v342 = vsel %vm316, %v265, 0.0
        %v343 = vadd.f32 %v341, %v342
        %v344 = vsel %vm316, %v266, 0.0
        %v345 = vadd.f32 %v343, %v344
        %v346 = vsel %vm316, %v267, 0.0
        %v347 = vadd.f32 %v345, %v346
        %v348 = vsel %vm316, %v246, 0.0
        %v349 = vadd.f32 %v347, %v348
        %v350 = vsel %vm316, %v268, 0.0
        %v351 = vadd.f32 %v349, %v350
        %v352 = vsel %vm316, %v269, 0.0
        %v353 = vadd.f32 %v351, %v352
        %v354 = vsel %vm316, %v270, 0.0
        %v355 = vadd.f32 %v353, %v354
        %v356 = vsel %vm316, %v271, 0.0
        %v357 = vadd.f32 %v355, %v356
        %v358 = vsel %vm316, %v272, 0.0
        %v359 = vadd.f32 %v357, %v358
        %v360 = vsel %vm316, %v273, 0.0
        %v361 = vadd.f32 %v359, %v360
        %v362 = vsel %vm316, %v274, 0.0
        %v363 = vadd.f32 %v361, %v362
        %v364 = vsel %vm316, %v247, 0.0
        %v365 = vadd.f32 %v363, %v364
        %v366 = vsel %vm316, %v275, 0.0
        %v367 = vadd.f32 %v365, %v366
        %v368 = vsel %vm316, %v276, 0.0
        %v369 = vadd.f32 %v367, %v368
        %v370 = vsel %vm316, %v277, 0.0
        %v371 = vadd.f32 %v369, %v370
        %v372 = vsel %vm316, %v278, 0.0
        %v373 = vadd.f32 %v371, %v372
        %v374 = vsel %vm316, %v279, 0.0
        %v375 = vadd.f32 %v373, %v374
        %v376 = vsel %vm316, %v280, 0.0
        %v377 = vadd.f32 %v375, %v376
        %v378 = vsel %vm316, %v281, 0.0
        %v379 = vadd.f32 %v377, %v378
        %v380 = vsel %vm316, %v248, 0.0
        %v381 = vadd.f32 %v379, %v380
        %v382 = vsel %vm316, %v282, 0.0
        %v383 = vadd.f32 %v381, %v382
        %v384 = vsel %vm316, %v283, 0.0
        %v385 = vadd.f32 %v383, %v384
        %v386 = vsel %vm316, %v284, 0.0
        %v387 = vadd.f32 %v385, %v386
        %v388 = vadd.f32 %v238, %v387
        %389 = vst [vmem:[%s217] sm:$0x1] %v388
      $region36: #{vae_step_losses.2} parent=27 // pred_fallthru
        _
      %p390 = scmp.lt.s32.totalorder %s17, 1
      %s391 = scalar_select %p390, %s17, 1
      %s392 = scalar_lea.vmem %s2, %s391
      // Predicated region
      $region37: #{vae_step_losses.2} parent=27 // pred_check
        %p393 = pneg %p107
      $region38: #{vae_step_losses.2} parent=27 // pred_check_branch
        %395 = sbr.rel (%p393) target = $region40
      $region39: #{vae_step_losses.2} parent=27 // pred_region
        _
      $region40: #{vae_step_losses.2} parent=27 // pred_fallthru
        _
    $region28: #{vae_step_losses.2} parent=5 // pred_fallthru
      _
    %p396 = scmp.le.s32.totalorder 2, %s8
    // Predicated region
    $region41: #{vae_step_losses.2} parent=5 // pred_check
      %p397 = pneg %p396
    $region42: #{vae_step_losses.2} parent=5 // pred_check_branch
      %399 = sbr.rel (%p397) target = $region44
    $region43: #{vae_step_losses.2} parent=5 // pred_region
      %s400 = ssub.s32 %s8, 2
      // Predicated region
      $region45: #{vae_step_losses.2} parent=43 // pred_check
        %p401 = pneg %p113
      $region46: #{vae_step_losses.2} parent=43 // pred_check_branch
        %403 = sbr.rel (%p401) target = $region48
      $region47: #{vae_step_losses.2} parent=43 // pred_region
        %p404 = scmp.lt.s32.totalorder %s19, 1
        %s405 = scalar_select %p404, %s19, 1
        %s406 = scalar_lea.vmem %s2, %s405
      $region48: #{vae_step_losses.2} parent=43 // pred_fallthru
        _
    $region44: #{vae_step_losses.2} parent=5 // pred_fallthru
      _
  $region6: #{vae_step_losses.2} parent=0 // loop_footer
    %s12 = sadd.s32 1, %s8
  $region7: #{vae_step_losses.2} parent=0 // loop_footer_branch
    %7 = sbr.rel target = $region3
  $region8: #{vae_step_losses.2} parent=0 // loop_exit
    _

// kernel: vae_step_losses.3
$region0: #{vae_step_losses.3}
  #allocation0 [shape = 'u32[]', space=smem, size = 0x4, offset = 0x4, fixed_abs, tag = 'smem constant byte address 0x4 - core index']
  #allocation1 [shape = 'u32[72,128]{1,0:T(1,128)}', space=vmem, size = 0x9000, scoped, tag = 'internal scratch']
  %s0 = inlined_call_operand.vmem [shape: f32[144,128], index: 0, kind: input, shape index: {}]
  %s1 = inlined_call_operand.vmem [shape: f32[144,128], index: 1, kind: input, shape index: {}]
  %s2 = inlined_call_operand.vmem [shape: f32[2,8,128], index: 2, kind: output, shape index: {}]
  %s3 = sld [smem:[#allocation0]]
  $region49: #{vae_step_losses.3} parent=0
    _
  %s5 = ssub.s32 1, %s3
  %s6 = scalar_select 0, %s5, %s3
  loop: start=0, step=1, limit=4
  $region2: #{vae_step_losses.3} parent=0 // loop_pre_header
    _
  $region3: #{vae_step_losses.3} parent=0 // loop_header
    %s8 = sphi 0, %s12
    %p9 = scmp.ge.s32.totalorder %s8, 4
    %s15 = sphi 0, %s27
    %s16 = sphi 0, %s23
    %s17 = sphi 0, %s15
    %s18 = sphi 0, %s16
    %s19 = sphi 0, %s17
    %s20 = sphi 0, %s18
    %s36 = sphi 0, %s38
    %s39 = sphi 0, %s36
    %s40 = sphi 0, %s39
    %s56 = sphi 0, %s40
    %s68 = sphi 0, %s70
    %s71 = sphi 0, %s68
    %s72 = sphi 0, %s71
    %s88 = sphi 0, %s72
    %s94 = sphi 0, %s96
    %s97 = sphi 0, %s94
    %s98 = sphi 0, %s97
    %s114 = sphi 0, %s98
  $region4: #{vae_step_losses.3} parent=0 // loop_header_branch
    %11 = sbr.rel (%p9) target = $region8
  $region5: #{vae_step_losses.3} parent=0 // loop_body
    %s13 = ssub.s32 %s8, 1
    %s14 = ssub.s32 %s8, 2
    %s21 = sadd.s32 1, %s16
    %p22 = scmp.ge.s32.totalorder %s21, 1
    %s23 = scalar_select %p22, 0, %s21
    %s24 = sadd.s32 1, %s15
    %s25 = scalar_select %p22, %s24, %s15
    %p26 = scmp.ge.s32.totalorder %s25, 2
    %s27 = scalar_select %p26, 0, %s25
    %s28 = sadd.s32 %s15, %s16
    %p29 = scmp.lt.s32.totalorder %s28, 0
    %s30 = scalar_select %p29, %s28, 0
    %s31 = sadd.s32 %s27, %s23
    %p32 = scmp.lt.s32.totalorder %s31, 0
    %s33 = scalar_select %p32, %s31, 0
    %s34 = ssub.s32 %s30, %s33
    %p35 = scmp.eq.s32.totalorder %s34, 0
    %s37 = sadd.s32 %s36, 1
    %s38 = scalar_select %p35, %s36, %s37
    %p41 = pneg %p35
    %p42 = scmp.eq.s32.totalorder %s8, 1
    %p43 = por %p41, %p42
    %p44 = scmp.ne.s32.totalorder %s36, %s39
    %p45 = scmp.eq.s32.totalorder %s8, 0
    %p46 = por %p44, %p45
    %p47 = scmp.ne.s32.totalorder %s36, %s39
    %p48 = scmp.eq.s32.totalorder %s13, 1
    %p49 = por %p47, %p48
    %p50 = scmp.ne.s32.totalorder %s39, %s40
    %p51 = scmp.eq.s32.totalorder %s13, 0
    %p52 = por %p50, %p51
    %p53 = scmp.ne.s32.totalorder %s39, %s40
    %p54 = scmp.eq.s32.totalorder %s14, 1
    %p55 = por %p53, %p54
    %p57 = scmp.ne.s32.totalorder %s40, %s56
    %p58 = scmp.eq.s32.totalorder %s14, 0
    %p59 = por %p57, %p58
    %s60 = sadd.s32 %s15, %s16
    %p61 = scmp.lt.s32.totalorder %s60, 0
    %s62 = scalar_select %p61, %s60, 0
    %s63 = sadd.s32 %s27, %s23
    %p64 = scmp.lt.s32.totalorder %s63, 0
    %s65 = scalar_select %p64, %s63, 0
    %s66 = ssub.s32 %s62, %s65
    %p67 = scmp.eq.s32.totalorder %s66, 0
    %s69 = sadd.s32 %s68, 1
    %s70 = scalar_select %p67, %s68, %s69
    %p73 = pneg %p67
    %p74 = scmp.eq.s32.totalorder %s8, 1
    %p75 = por %p73, %p74
    %p76 = scmp.ne.s32.totalorder %s68, %s71
    %p77 = scmp.eq.s32.totalorder %s8, 0
    %p78 = por %p76, %p77
    %p79 = scmp.ne.s32.totalorder %s68, %s71
    %p80 = scmp.eq.s32.totalorder %s13, 1
    %p81 = por %p79, %p80
    %p82 = scmp.ne.s32.totalorder %s71, %s72
    %p83 = scmp.eq.s32.totalorder %s13, 0
    %p84 = por %p82, %p83
    %p85 = scmp.ne.s32.totalorder %s71, %s72
    %p86 = scmp.eq.s32.totalorder %s14, 1
    %p87 = por %p85, %p86
    %p89 = scmp.ne.s32.totalorder %s72, %s88
    %p90 = scmp.eq.s32.totalorder %s14, 0
    %p91 = por %p89, %p90
    %s92 = ssub.s32 %s15, %s27
    %p93 = scmp.eq.s32.totalorder %s92, 0
    %s95 = sadd.s32 %s94, 1
    %s96 = scalar_select %p93, %s94, %s95
    %p99 = pneg %p93
    %p100 = scmp.eq.s32.totalorder %s8, 1
    %p101 = por %p99, %p100
    %p102 = scmp.ne.s32.totalorder %s94, %s97
    %p103 = scmp.eq.s32.totalorder %s8, 0
    %p104 = por %p102, %p103
    %p105 = scmp.ne.s32.totalorder %s94, %s97
    %p106 = scmp.eq.s32.totalorder %s13, 1
    %p107 = por %p105, %p106
    %p108 = scmp.ne.s32.totalorder %s97, %s98
    %p109 = scmp.eq.s32.totalorder %s13, 0
    %p110 = por %p108, %p109
    %p111 = scmp.ne.s32.totalorder %s97, %s98
    %p112 = scmp.eq.s32.totalorder %s14, 1
    %p113 = por %p111, %p112
    %p115 = scmp.ne.s32.totalorder %s98, %s114
    %p116 = scmp.eq.s32.totalorder %s14, 0
    %p117 = por %p115, %p116
    %p118 = scmp.le.s32.totalorder 1, %s8
    %p119 = scmp.lt.s32.totalorder %s8, 3
    %p120 = pnand %p118, %p119
    %p121 = pneg %p120
    // Predicated region
    $region9: #{vae_step_losses.3} parent=5 // pred_check
      _
    $region10: #{vae_step_losses.3} parent=5 // pred_check_branch
      %123 = sbr.rel (%p120) target = $region12
    $region11: #{vae_step_losses.3} parent=5 // pred_region
      %s124 = ssub.s32 %s8, 1
    $region12: #{vae_step_losses.3} parent=5 // pred_fallthru
      _
    %p125 = scmp.lt.s32.totalorder %s8, 2
    // Predicated region
    $region13: #{vae_step_losses.3} parent=5 // pred_check
      %p126 = pneg %p125
    $region14: #{vae_step_losses.3} parent=5 // pred_check_branch
      %128 = sbr.rel (%p126) target = $region16
    $region15: #{vae_step_losses.3} parent=5 // pred_region
      // Predicated region
      $region17: #{vae_step_losses.3} parent=15 // pred_check
        %p129 = pneg %p46
      $region18: #{vae_step_losses.3} parent=15 // pred_check_branch
        %131 = sbr.rel (%p129) target = $region20
      $region19: #{vae_step_losses.3} parent=15 // pred_region
        %s132 = sadd.s32 %s15, %s16
        %p133 = scmp.lt.s32.totalorder %s132, 0
        %s134 = scalar_select %p133, %s132, 0
        %s135 = smul.u32 18, %s134
        %p136 = scmp.lt.s32.totalorder %s135, 17
        %s137 = scalar_select %p136, %s135, 17
        %s138 = smul.addr %s137, 8
        %s139 = scalar_lea.vmem %s0, %s138
        %s140 = sadd.s32 %s15, %s16
        %p141 = scmp.lt.s32.totalorder %s140, 0
        %s142 = scalar_select %p141, %s140, 0
        %s143 = smul.u32 18, %s142
      $region20: #{vae_step_losses.3} parent=15 // pred_fallthru
        _
      // Predicated region
      $region21: #{vae_step_losses.3} parent=15 // pred_check
        %p144 = pneg %p78
      $region22: #{vae_step_losses.3} parent=15 // pred_check_branch
        %146 = sbr.rel (%p144) target = $region24
      $region23: #{vae_step_losses.3} parent=15 // pred_region
        %s147 = sadd.s32 %s15, %s16
        %p148 = scmp.lt.s32.totalorder %s147, 0
        %s149 = scalar_select %p148, %s147, 0
        %s150 = smul.u32 18, %s149
        %p151 = scmp.lt.s32.totalorder %s150, 17
        %s152 = scalar_select %p151, %s150, 17
        %s153 = smul.addr %s152, 8
        %s154 = scalar_lea.vmem %s1, %s153
        %s155 = sadd.s32 %s15, %s16
        %p156 = scmp.lt.s32.totalorder %s155, 0
        %s157 = scalar_select %p156, %s155, 0
        %s158 = smul.u32 18, %s157
      $region24: #{vae_step_losses.3} parent=15 // pred_fallthru
        _
    $region16: #{vae_step_losses.3} parent=5 // pred_fallthru
      _
    %p159 = scmp.le.s32.totalorder 1, %s8
    %p160 = scmp.lt.s32.totalorder %s8, 3
    %p161 = pnand %p159, %p160
    %p162 = pneg %p161
    // Predicated region
    $region25: #{vae_step_losses.3} parent=5 // pred_check
      _
    $region26: #{vae_step_losses.3} parent=5 // pred_check_branch
      %164 = sbr.rel (%p161) target = $region28
    $region27: #{vae_step_losses.3} parent=5 // pred_region
      %s165 = ssub.s32 %s8, 1
      %s166 = sadd.s32 %s17, %s18
      %p167 = scmp.lt.s32.totalorder %s166, 0
      %s168 = scalar_select %p167, %s166, 0
      %s169 = smul.u32 18, %s168
      %p170 = scmp.lt.s32.totalorder %s169, 17
      %s171 = scalar_select %p170, %s169, 17
      %s172 = smul.addr %s171, 8
      %s173 = scalar_lea.vmem %s0, %s172
      %p174 = pneg %p52
      %p175 = pneg %p49
      %s176 = sadd.s32 %s17, %s18
      %p177 = scmp.lt.s32.totalorder %s176, 0
      %s178 = scalar_select %p177, %s176, 0
      %s179 = smul.u32 18, %s178
      %p180 = scmp.lt.s32.totalorder %s179, 17
      %s181 = scalar_select %p180, %s179, 17
      %s182 = smul.addr %s181, 8
      %s183 = scalar_lea.vmem %s1, %s182
      %p184 = pneg %p84
      %p185 = pneg %p81
      %p186 = pneg %p110
      %p187 = pneg %p107
      %p188 = scmp.lt.s32.totalorder %s17, 1
      %s189 = scalar_select %p188, %s17, 1
      %s190 = smul.addr %s189, 8
      %s191 = scalar_lea.vmem %s2, %s190
      %s192 = sadd.s32 %s17, %s18
      %p193 = scmp.lt.s32.totalorder %s192, 0
      %s194 = scalar_select %p193, %s192, 0
      %s195 = smul.u32 18, %s194
      %p196 = scmp.lt.s32.totalorder %s195, 17
      %s197 = scalar_select %p196, %s195, 17
      %s198 = smul.addr %s197, 8
      %s199 = scalar_lea.vmem %s0, %s198
      %s200 = sadd.s32 %s17, %s18
      %p201 = scmp.lt.s32.totalorder %s200, 0
      %s202 = scalar_select %p201, %s200, 0
      %s203 = smul.u32 18, %s202
      %s204 = sadd.s32 %s17, %s18
      %p205 = scmp.lt.s32.totalorder %s204, 0
      %s206 = scalar_select %p205, %s204, 0
      %s207 = smul.u32 18, %s206
      %p208 = scmp.lt.s32.totalorder %s207, 17
      %s209 = scalar_select %p208, %s207, 17
      %s210 = smul.addr %s209, 8
      %s211 = scalar_lea.vmem %s1, %s210
      %s212 = sadd.s32 %s17, %s18
      %p213 = scmp.lt.s32.totalorder %s212, 0
      %s214 = scalar_select %p213, %s212, 0
      %s215 = smul.u32 18, %s214
      %p216 = scmp.lt.s32.totalorder %s17, 1
      %s217 = scalar_select %p216, %s17, 1
      %s218 = smul.addr %s217, 8
      %s219 = scalar_lea.vmem %s2, %s218
      %s220 = sadd.s32 %s17, %s18
      %p221 = scmp.eq.s32.totalorder %s18, 0
      // Predicated region
      $region29: #{vae_step_losses.3} parent=27 // pred_check
        %p222 = pneg %p221
      $region30: #{vae_step_losses.3} parent=27 // pred_check_branch
        %224 = sbr.rel (%p222) target = $region32
      $region31: #{vae_step_losses.3} parent=27 // pred_region
        %225 = vst [vmem:[%s219] sm:$0xff] 0.0
      $region32: #{vae_step_losses.3} parent=27 // pred_fallthru
        _
      %p226 = scmp.lt.s32.totalorder %s220, 1
      // Predicated region
      $region33: #{vae_step_losses.3} parent=27 // pred_check
        %p227 = pneg %p226
      $region34: #{vae_step_losses.3} parent=27 // pred_check_branch
        %229 = sbr.rel (%p227) target = $region36
      $region35: #{vae_step_losses.3} parent=27 // pred_region
        %v230 = vld [vmem:[%s199] sm:$0xff]
        %v231 = vld [vmem:[%s199 + $0x8] sm:$0xff]
        %v232 = vld [vmem:[%s199 + $0x10] sm:$0xff]
        %v233 = vld [vmem:[%s199 + $0x18] sm:$0xff]
        %v234 = vld [vmem:[%s199 + $0x20] sm:$0xff]
        %v235 = vld [vmem:[%s199 + $0x28] sm:$0xff]
        %v236 = vld [vmem:[%s199 + $0x30] sm:$0xff]
        %v237 = vld [vmem:[%s199 + $0x38] sm:$0xff]
        %v238 = vld [vmem:[%s199 + $0x40] sm:$0xff]
        %v239 = vld [vmem:[%s199 + $0x48] sm:$0xff]
        %v240 = vld [vmem:[%s199 + $0x50] sm:$0xff]
        %v241 = vld [vmem:[%s199 + $0x58] sm:$0xff]
        %v242 = vld [vmem:[%s199 + $0x60] sm:$0xff]
        %v243 = vld [vmem:[%s199 + $0x68] sm:$0xff]
        %v244 = vld [vmem:[%s199 + $0x70] sm:$0xff]
        %v245 = vld [vmem:[%s199 + $0x78] sm:$0xff]
        %v246 = vld [vmem:[%s199 + $0x80] sm:$0xff]
        %v247 = vld [vmem:[%s199 + $0x88] sm:$0xff]
        %v248 = vld [vmem:[%s211] sm:$0xff]
        %v249 = vld [vmem:[%s211 + $0x8] sm:$0xff]
        %v250 = vld [vmem:[%s211 + $0x10] sm:$0xff]
        %v251 = vld [vmem:[%s211 + $0x18] sm:$0xff]
        %v252 = vld [vmem:[%s211 + $0x20] sm:$0xff]
        %v253 = vld [vmem:[%s211 + $0x28] sm:$0xff]
        %v254 = vld [vmem:[%s211 + $0x30] sm:$0xff]
        %v255 = vld [vmem:[%s211 + $0x38] sm:$0xff]
        %v256 = vld [vmem:[%s211 + $0x40] sm:$0xff]
        %v257 = vld [vmem:[%s211 + $0x48] sm:$0xff]
        %v258 = vld [vmem:[%s211 + $0x50] sm:$0xff]
        %v259 = vld [vmem:[%s211 + $0x58] sm:$0xff]
        %v260 = vld [vmem:[%s211 + $0x60] sm:$0xff]
        %v261 = vld [vmem:[%s211 + $0x68] sm:$0xff]
        %v262 = vld [vmem:[%s211 + $0x70] sm:$0xff]
        %v263 = vld [vmem:[%s211 + $0x78] sm:$0xff]
        %v264 = vld [vmem:[%s211 + $0x80] sm:$0xff]
        %v265 = vld [vmem:[%s211 + $0x88] sm:$0xff]
        %v266 = vld [vmem:[%s219] sm:$0xff]
        %v267 = vadd.f32 %v248, 1.0
        %v268 = vadd.f32 %v249, 1.0
        %v269 = vadd.f32 %v250, 1.0
        %v270 = vadd.f32 %v251, 1.0
        %v271 = vadd.f32 %v252, 1.0
        %v272 = vadd.f32 %v253, 1.0
        %v273 = vadd.f32 %v254, 1.0
        %v274 = vadd.f32 %v255, 1.0
        %v275 = vadd.f32 %v256, 1.0
        %v276 = vadd.f32 %v257, 1.0
        %v277 = vadd.f32 %v258, 1.0
        %v278 = vadd.f32 %v259, 1.0
        %v279 = vadd.f32 %v260, 1.0
        %v280 = vadd.f32 %v261, 1.0
        %v281 = vadd.f32 %v262, 1.0
        %v282 = vadd.f32 %v263, 1.0
        %v283 = vadd.f32 %v264, 1.0
        %v284 = vadd.f32 %v265, 1.0
        %v285 = vmul.f32 %v230, %v230
        %v286 = vmul.f32 %v231, %v231
        %v287 = vmul.f32 %v232, %v232
        %v288 = vmul.f32 %v233, %v233
        %v289 = vmul.f32 %v234, %v234
        %v290 = vmul.f32 %v235, %v235
        %v291 = vmul.f32 %v236, %v236
        %v292 = vmul.f32 %v237, %v237
        %v293 = vmul.f32 %v238, %v238
        %v294 = vmul.f32 %v239, %v239
        %v295 = vmul.f32 %v240, %v240
        %v296 = vmul.f32 %v241, %v241
        %v297 = vmul.f32 %v242, %v242
        %v298 = vmul.f32 %v243, %v243
        %v299 = vmul.f32 %v244, %v244
        %v300 = vmul.f32 %v245, %v245
        %v301 = vmul.f32 %v246, %v246
        %v302 = vmul.f32 %v247, %v247
        %v303 = vsub.f32 %v267, %v285
        %v304 = vsub.f32 %v268, %v286
        %v305 = vsub.f32 %v269, %v287
        %v306 = vsub.f32 %v270, %v288
        %v307 = vsub.f32 %v271, %v289
        %v308 = vsub.f32 %v272, %v290
        %v309 = vsub.f32 %v273, %v291
        %v310 = vsub.f32 %v274, %v292
        %v311 = vsub.f32 %v275, %v293
        %v312 = vsub.f32 %v276, %v294
        %v313 = vsub.f32 %v277, %v295
        %v314 = vsub.f32 %v278, %v296
        %v315 = vsub.f32 %v279, %v297
        %v316 = vsub.f32 %v280, %v298
        %v317 = vsub.f32 %v281, %v299
        %v318 = vsub.f32 %v282, %v300
        %v319 = vsub.f32 %v283, %v301
        %v320 = vsub.f32 %v284, %v302
        %v321 = vmul.f32 %v248, 1.442695
        %v322 = vpow.pop %v321
        %v323 = vmul.f32 %v249, 1.442695
        %v324 = vpow.pop %v323
        %v325 = vmul.f32 %v250, 1.442695
        %v326 = vpow.pop %v325
        %v327 = vmul.f32 %v251, 1.442695
        %v328 = vpow.pop %v327
        %v329 = vmul.f32 %v252, 1.442695
        %v330 = vpow.pop %v329
        %v331 = vmul.f32 %v253, 1.442695
        %v332 = vpow.pop %v331
        %v333 = vmul.f32 %v254, 1.442695
        %v334 = vpow.pop %v333
        %v335 = vmul.f32 %v255, 1.442695
        %v336 = vpow.pop %v335
        %v337 = vmul.f32 %v256, 1.442695
        %v338 = vpow.pop %v337
        %v339 = vmul.f32 %v257, 1.442695
        %v340 = vpow.pop %v339
        %v341 = vmul.f32 %v258, 1.442695
        %v342 = vpow.pop %v341
        %v343 = vmul.f32 %v259, 1.442695
        %v344 = vpow.pop %v343
        %v345 = vmul.f32 %v260, 1.442695
        %v346 = vpow.pop %v345
        %v347 = vmul.f32 %v261, 1.442695
        %v348 = vpow.pop %v347
        %v349 = vmul.f32 %v262, 1.442695
        %v350 = vpow.pop %v349
        %v351 = vmul.f32 %v263, 1.442695
        %v352 = vpow.pop %v351
        %v353 = vmul.f32 %v264, 1.442695
        %v354 = vpow.pop %v353
        %v355 = vmul.f32 %v265, 1.442695
        %v356 = vpow.pop %v355
        %v357 = vsub.f32 %v303, %v322
        %v358 = vsub.f32 %v304, %v324
        %v359 = vsub.f32 %v305, %v326
        %v360 = vsub.f32 %v306, %v328
        %v361 = vsub.f32 %v307, %v330
        %v362 = vsub.f32 %v308, %v332
        %v363 = vsub.f32 %v309, %v334
        %v364 = vsub.f32 %v310, %v336
        %v365 = vsub.f32 %v311, %v338
        %v366 = vsub.f32 %v312, %v340
        %v367 = vsub.f32 %v313, %v342
        %v368 = vsub.f32 %v314, %v344
        %v369 = vsub.f32 %v315, %v346
        %v370 = vsub.f32 %v316, %v348
        %v371 = vsub.f32 %v317, %v350
        %v372 = vsub.f32 %v318, %v352
        %v373 = vsub.f32 %v319, %v354
        %v374 = vsub.f32 %v320, %v356
        %v375 = vadd.f32 %v357, %v358
        %v376 = vadd.f32 %v375, %v359
        %v377 = vadd.f32 %v376, %v360
        %v378 = vadd.f32 %v377, %v361
        %v379 = vadd.f32 %v378, %v362
        %v380 = vadd.f32 %v379, %v363
        %v381 = vadd.f32 %v380, %v364
        %v382 = vadd.f32 %v381, %v365
        %v383 = vadd.f32 %v382, %v366
        %v384 = vadd.f32 %v383, %v367
        %v385 = vadd.f32 %v384, %v368
        %v386 = vadd.f32 %v385, %v369
        %v387 = vadd.f32 %v386, %v370
        %v388 = vadd.f32 %v387, %v371
        %v389 = vadd.f32 %v388, %v372
        %v390 = vadd.f32 %v389, %v373
        %v391 = vadd.f32 %v390, %v374
        %v392 = vadd.f32 %v266, %v391
        %393 = vst [vmem:[%s219] sm:$0xff] %v392
      $region36: #{vae_step_losses.3} parent=27 // pred_fallthru
        _
      %p394 = scmp.lt.s32.totalorder %s17, 1
      %s395 = scalar_select %p394, %s17, 1
      %s396 = smul.addr %s395, 8
      %s397 = scalar_lea.vmem %s2, %s396
      // Predicated region
      $region37: #{vae_step_losses.3} parent=27 // pred_check
        %p398 = pneg %p107
      $region38: #{vae_step_losses.3} parent=27 // pred_check_branch
        %400 = sbr.rel (%p398) target = $region40
      $region39: #{vae_step_losses.3} parent=27 // pred_region
        _
      $region40: #{vae_step_losses.3} parent=27 // pred_fallthru
        _
    $region28: #{vae_step_losses.3} parent=5 // pred_fallthru
      _
    %p401 = scmp.le.s32.totalorder 2, %s8
    // Predicated region
    $region41: #{vae_step_losses.3} parent=5 // pred_check
      %p402 = pneg %p401
    $region42: #{vae_step_losses.3} parent=5 // pred_check_branch
      %404 = sbr.rel (%p402) target = $region44
    $region43: #{vae_step_losses.3} parent=5 // pred_region
      %s405 = ssub.s32 %s8, 2
      // Predicated region
      $region45: #{vae_step_losses.3} parent=43 // pred_check
        %p406 = pneg %p113
      $region46: #{vae_step_losses.3} parent=43 // pred_check_branch
        %408 = sbr.rel (%p406) target = $region48
      $region47: #{vae_step_losses.3} parent=43 // pred_region
        %p409 = scmp.lt.s32.totalorder %s19, 1
        %s410 = scalar_select %p409, %s19, 1
        %s411 = smul.addr %s410, 8
        %s412 = scalar_lea.vmem %s2, %s411
      $region48: #{vae_step_losses.3} parent=43 // pred_fallthru
        _
    $region44: #{vae_step_losses.3} parent=5 // pred_fallthru
      _
  $region6: #{vae_step_losses.3} parent=0 // loop_footer
    %s12 = sadd.s32 1, %s8
  $region7: #{vae_step_losses.3} parent=0 // loop_footer_branch
    %7 = sbr.rel target = $region3
  $region8: #{vae_step_losses.3} parent=0 // loop_exit
    _

</llo_original>
